<compile_context>
chip_gen: v7x
topology: tpu7x:2x2x1
jax: 0.10.0
libtpu: 0.0.40
codegen_flags: <defaults>
</compile_context>

<pallas_src>
import jax
import jax.numpy as jnp
from jax.experimental import pallas as pl
from jax.experimental.pallas import tpu as pltpu

WINDOW_SIZE = 20
HIDDEN = 64
OUT = 3
LANE = 128


def _round_up(x, m):
    return (x + m - 1) // m * m


def encoder_kernel(xT_ref, w1T_ref, b1_ref, w2T_ref, b2_ref, o_ref):
    # xT_ref: (20, tb) bf16   w1T_ref: (64, 20) bf16   b1_ref: (64, 1) f32
    # w2T_ref: (3, 64) bf16   b2_ref:  (3, 1)  f32     o_ref:  (3, tb) f32
    xT = xT_ref[...]
    h = jnp.dot(w1T_ref[...], xT, preferred_element_type=jnp.float32)     # (64, tb)
    h = jnp.maximum(h + b1_ref[...], 0.0)                                 # bias + ReLU (f32)
    y = jnp.dot(w2T_ref[...], h.astype(jnp.bfloat16),
                preferred_element_type=jnp.float32)                       # (3, tb)
    o_ref[...] = (y + b2_ref[...]).astype(o_ref.dtype)


def encoder_forward(x, w1, b1, w2, b2, *, batch_tile=2048):
    """x: (B, 20) f32, w1: (20, 64), b1: (64,), w2: (64, 3), b2: (3,) -> (B, 3) f32."""
    B, F = x.shape
    assert F == WINDOW_SIZE
    assert batch_tile % LANE == 0, "batch_tile must be a multiple of 128 (lane width)"

    # Tile choice: lane-multiple, capped by batch_tile, and keep >= 2 grid steps
    # so the parallel batch axis can use both v7x TensorCores.
    tb = min(batch_tile, max(LANE, _round_up(pl.cdiv(B, 2), LANE)))
    Bp = max(_round_up(B, tb), 2 * tb)
    grid = (Bp // tb,)

    # Wrapper-side layout prep (XLA fuses pad + transpose + cast into one pass).
    x_p = jnp.pad(x, ((0, Bp - B), (0, 0)))
    xT = x_p.T.astype(jnp.bfloat16)                      # (20, Bp)
    w1T = w1.T.astype(jnp.bfloat16)                      # (64, 20)
    w2T = w2.T.astype(jnp.bfloat16)                      # (3, 64)
    b1c = b1.reshape(HIDDEN, 1).astype(jnp.float32)
    b2c = b2.reshape(OUT, 1).astype(jnp.float32)

    cost = pl.CostEstimate(
        flops=2 * Bp * (WINDOW_SIZE * HIDDEN + HIDDEN * OUT),
        transcendentals=0,
        bytes_accessed=(Bp * WINDOW_SIZE * 2 + Bp * OUT * 4
                        + (WINDOW_SIZE * HIDDEN + HIDDEN * OUT) * 2
                        + (HIDDEN + OUT) * 4),
    )

    yT = pl.pallas_call(
        encoder_kernel,
        out_shape=jax.ShapeDtypeStruct((OUT, Bp), jnp.float32),
        grid_spec=pltpu.PrefetchScalarGridSpec(
            num_scalar_prefetch=0,
            grid=grid,
            in_specs=[
                # activations: tiled along the (lane) batch dimension.
                # TODO(synk): bump to pipeline_mode=pl.Buffered(3) only if a
                # profile shows exposed DMA on this stream at very large tiles.
                pl.BlockSpec((WINDOW_SIZE, tb), lambda i: (0, i)),
                # parameters: full arrays, resident across every grid step.
                pl.BlockSpec((HIDDEN, WINDOW_SIZE), lambda i: (0, 0)),
                pl.BlockSpec((HIDDEN, 1), lambda i: (0, 0)),
                pl.BlockSpec((OUT, HIDDEN), lambda i: (0, 0)),
                pl.BlockSpec((OUT, 1), lambda i: (0, 0)),
            ],
            out_specs=pl.BlockSpec((OUT, tb), lambda i: (0, i)),
        ),
        compiler_params=pltpu.CompilerParams(
            dimension_semantics=("parallel",),
            # 48 MiB cap: leaves headroom on v7x (64 MiB physical per TC) while
            # comfortably raising the default scoped limit on v5e/v6e.
            vmem_limit_bytes=48 * 1024 * 1024,
        ),
        cost_estimate=cost,
    )(xT, w1T, b1c, w2T, b2c)

    return yT.T[:B]                                       # (B, 3) f32


def init_params(key):
    # Deterministic init mimicking PyTorch nn.Linear default: U(-1/sqrt(fan_in), +1/sqrt(fan_in)).
    k1, k2, k3, k4 = jax.random.split(key, 4)
    lim1 = 1.0 / (WINDOW_SIZE ** 0.5)
    lim2 = 1.0 / (HIDDEN ** 0.5)
    w1 = jax.random.uniform(k1, (WINDOW_SIZE, HIDDEN), jnp.float32, -lim1, lim1)
    b1 = jax.random.uniform(k2, (HIDDEN,), jnp.float32, -lim1, lim1)
    w2 = jax.random.uniform(k3, (HIDDEN, OUT), jnp.float32, -lim2, lim2)
    b2 = jax.random.uniform(k4, (OUT,), jnp.float32, -lim2, lim2)
    return w1, b1, w2, b2


def encoder_ref(x, w1, b1, w2, b2):
    # Pure-JAX f32 reference for verification.
    h = jnp.maximum(x @ w1 + b1, 0.0)
    return h @ w2 + b2


if __name__ == "__main__":
    key = jax.random.PRNGKey(0)
    kx, kp = jax.random.split(key)

    B = 16  # small batch; padded/tiled internally to lane-dense 128-wide blocks
    x = jax.random.normal(kx, (B, WINDOW_SIZE), dtype=jnp.float32)
    w1, b1, w2, b2 = init_params(kp)

    out = encoder_forward(x, w1, b1, w2, b2)
    out = jax.block_until_ready(out)

    ref = encoder_ref(x, w1, b1, w2, b2)
    assert out.shape == (B, OUT)
    # bf16 matmul inputs (with f32 accumulation) -> loosened tolerance vs f32 ref.
    assert jnp.allclose(out, ref, atol=3e-2, rtol=3e-2), "mismatch vs reference"

    print("KERNEL_OK")
</pallas_src>

<mosaic_0001>
module attributes {stable_mosaic.version = 11 : i64} {
  func.func @encoder_kernel(%arg0: i32, %arg1: memref<20x128xbf16, #tpu.memory_space<vmem>>, %arg2: memref<64x20xbf16, #tpu.memory_space<vmem>>, %arg3: memref<64x1xf32, #tpu.memory_space<vmem>>, %arg4: memref<3x64xbf16, #tpu.memory_space<vmem>>, %arg5: memref<3x1xf32, #tpu.memory_space<vmem>>, %arg6: memref<3x128xf32, #tpu.memory_space<vmem>>) attributes {dimension_semantics = [#tpu.dimension_semantics<parallel>], iteration_bounds = array<i64: 2>, scalar_prefetch = 0 : i64, scratch_operands = 0 : i64, tpu.core_type = #tpu.core_type<tc>, window_params = [{transform_indices = @transform_0, window_bounds = array<i64: 20, 128>}, {pipeline_mode = #tpu.pipeline_mode<synchronous>, transform_indices = @transform_1, window_bounds = array<i64: 64, 20>}, {pipeline_mode = #tpu.pipeline_mode<synchronous>, transform_indices = @transform_2, window_bounds = array<i64: 64, 1>}, {pipeline_mode = #tpu.pipeline_mode<synchronous>, transform_indices = @transform_3, window_bounds = array<i64: 3, 64>}, {pipeline_mode = #tpu.pipeline_mode<synchronous>, transform_indices = @transform_4, window_bounds = array<i64: 3, 1>}, {transform_indices = @transform_5, window_bounds = array<i64: 3, 128>}]} {
    %c0 = arith.constant 0 : index
    %c0_0 = arith.constant 0 : index
    %0 = vector.load %arg1[%c0, %c0_0] : memref<20x128xbf16, #tpu.memory_space<vmem>>, vector<20x128xbf16>
    %c0_1 = arith.constant 0 : index
    %c0_2 = arith.constant 0 : index
    %1 = vector.load %arg2[%c0_1, %c0_2] : memref<64x20xbf16, #tpu.memory_space<vmem>>, vector<64x20xbf16>
    %cst = arith.constant dense<0.000000e+00> : vector<64x128xf32>
    %2 = tpu.matmul %1, %0, %cst {dimension_numbers = #tpu.dot_dimension_numbers<[1], [0], [0], [1], [0, 0, 1, 1], [], []>} : vector<64x20xbf16>, vector<20x128xbf16>, vector<64x128xf32> -> vector<64x128xf32>
    %c0_3 = arith.constant 0 : index
    %c0_4 = arith.constant 0 : index
    %3 = vector.load %arg3[%c0_3, %c0_4] : memref<64x1xf32, #tpu.memory_space<vmem>>, vector<64x1xf32>
    %4 = vector.broadcast %3 : vector<64x1xf32> to vector<64x128xf32>
    %5 = arith.addf %2, %4 : vector<64x128xf32>
    %cst_5 = arith.constant 0.000000e+00 : f32
    %6 = vector.broadcast %cst_5 : f32 to vector<64x128xf32>
    %7 = arith.maximumf %5, %6 : vector<64x128xf32>
    %c0_6 = arith.constant 0 : index
    %c0_7 = arith.constant 0 : index
    %8 = vector.load %arg4[%c0_6, %c0_7] : memref<3x64xbf16, #tpu.memory_space<vmem>>, vector<3x64xbf16>
    %9 = arith.truncf %7 : vector<64x128xf32> to vector<64x128xbf16>
    %cst_8 = arith.constant dense<0.000000e+00> : vector<3x128xf32>
    %10 = tpu.matmul %8, %9, %cst_8 {dimension_numbers = #tpu.dot_dimension_numbers<[1], [0], [0], [1], [0, 0, 1, 1], [], []>} : vector<3x64xbf16>, vector<64x128xbf16>, vector<3x128xf32> -> vector<3x128xf32>
    %c0_9 = arith.constant 0 : index
    %c0_10 = arith.constant 0 : index
    %11 = vector.load %arg5[%c0_9, %c0_10] : memref<3x1xf32, #tpu.memory_space<vmem>>, vector<3x1xf32>
    %12 = vector.broadcast %11 : vector<3x1xf32> to vector<3x128xf32>
    %13 = arith.addf %10, %12 : vector<3x128xf32>
    %c0_11 = arith.constant 0 : index
    %c0_12 = arith.constant 0 : index
    %14 = vector.load %arg6[%c0_11, %c0_12] : memref<3x128xf32, #tpu.memory_space<vmem>>, vector<3x128xf32>
    tpu.vector_store %arg6[%c0_11, %c0_12], %13 {strides = array<i32>} : memref<3x128xf32, #tpu.memory_space<vmem>>, vector<3x128xf32>,
    return
  }
  func.func @transform_0(%arg0: i32) -> (i32, i32) {
    %c0_i32 = arith.constant 0 : i32
    %c0_i32_0 = arith.constant 0 : i32
    return %c0_i32, %arg0 : i32, i32
  }
  func.func @transform_1(%arg0: i32) -> (i32, i32) {
    %c0_i32 = arith.constant 0 : i32
    %c0_i32_0 = arith.constant 0 : i32
    %c0_i32_1 = arith.constant 0 : i32
    return %c0_i32, %c0_i32_0 : i32, i32
  }
  func.func @transform_2(%arg0: i32) -> (i32, i32) {
    %c0_i32 = arith.constant 0 : i32
    %c0_i32_0 = arith.constant 0 : i32
    %c0_i32_1 = arith.constant 0 : i32
    return %c0_i32, %c0_i32_0 : i32, i32
  }
  func.func @transform_3(%arg0: i32) -> (i32, i32) {
    %c0_i32 = arith.constant 0 : i32
    %c0_i32_0 = arith.constant 0 : i32
    %c0_i32_1 = arith.constant 0 : i32
    return %c0_i32, %c0_i32_0 : i32, i32
  }
  func.func @transform_4(%arg0: i32) -> (i32, i32) {
    %c0_i32 = arith.constant 0 : i32
    %c0_i32_0 = arith.constant 0 : i32
    %c0_i32_1 = arith.constant 0 : i32
    return %c0_i32, %c0_i32_0 : i32, i32
  }
  func.func @transform_5(%arg0: i32) -> (i32, i32) {
    %c0_i32 = arith.constant 0 : i32
    %c0_i32_0 = arith.constant 0 : i32
    return %c0_i32, %arg0 : i32, i32
  }
}

</mosaic_0001>

<llo_original>
// kernel: tpu_custom_call.1
$region0: #{tpu_custom_call.1}
  #allocation0 [shape = 'u32[]', space=smem, size = 0x4, offset = 0x4, fixed_abs, tag = 'smem constant byte address 0x4 - core index']
  #allocation1 [shape = 'u32[144,128]{1,0:T(1,128)}', space=vmem, size = 0x12000, scoped, tag = 'internal scratch']
  %s0 = inlined_call_operand.vmem [shape: bf16[20,256], index: 0, kind: input, shape index: {}]
  %s1 = inlined_call_operand.vmem [shape: bf16[64,20], index: 1, kind: input, shape index: {}]
  %s2 = inlined_call_operand.vmem [shape: f32[64,1], index: 2, kind: input, shape index: {}]
  %s3 = inlined_call_operand.vmem [shape: bf16[3,64], index: 3, kind: input, shape index: {}]
  %s4 = inlined_call_operand.vmem [shape: f32[3,1], index: 4, kind: input, shape index: {}]
  %s5 = inlined_call_operand.hbm [shape: f32[3,256], index: 5, kind: output, shape index: {}]
  %s6 = sld [smem:[#allocation0]]
  $region94: #{tpu_custom_call.1} parent=0
    _
  %s8 = ssub.s32 1, %s6
  %s9 = scalar_select 0, %s8, %s6
  $region1: #{tpu_custom_call.1} parent=0
    #allocation2 [shape = 'u8[12288]{0}', space=vmem, size = 0x3000, scoped, tag = 'input window, operand 0']
    #allocation3 [shape = 'u8[4096]{0}', space=vmem, size = 0x1000, scoped, tag = 'output window, operand 0']
    #allocation4 [shape = 's32[2]{0}', space=sflag, size = 0x8, scoped, tag = 'scoped memory for tpu_custom_call.1']
    %10 = vsyncpa [#allocation4], 0
    %s11 = scalar_lea.sflag [#allocation4], 1
    %12 = vsyncpa %s11, 0
    loop: start=0, step=1, limit=4
    $region2: #{tpu_custom_call.1} parent=1 // loop_pre_header
      _
    $region3: #{tpu_custom_call.1} parent=1 // loop_header
      %s14 = sphi 0, %s18
      %p15 = scmp.ge.s32.totalorder %s14, 4
      %s24 = sphi 0, %s26
      %s27 = sphi 0, %s24
      %s28 = sphi 0, %s27
      %s44 = sphi 0, %s28
      %s48 = sphi 0, %s48
      %s50 = sphi 0, %s48
      %s51 = sphi 0, %s50
      %s65 = sphi 0, %s51
      %s69 = sphi 0, %s69
      %s71 = sphi 0, %s69
      %s72 = sphi 0, %s71
      %s86 = sphi 0, %s72
      %s90 = sphi 0, %s90
      %s92 = sphi 0, %s90
      %s93 = sphi 0, %s92
      %s107 = sphi 0, %s93
      %s111 = sphi 0, %s111
      %s113 = sphi 0, %s111
      %s114 = sphi 0, %s113
      %s128 = sphi 0, %s114
      %s134 = sphi 0, %s136
      %s137 = sphi 0, %s134
      %s138 = sphi 0, %s137
      %s154 = sphi 0, %s138
    $region4: #{tpu_custom_call.1} parent=1 // loop_header_branch
      %17 = sbr.rel (%p15) target = $region8
    $region5: #{tpu_custom_call.1} parent=1 // loop_body
      %s19 = ssub.s32 %s14, 1
      %s20 = ssub.s32 %s14, 2
      %s21 = sadd.s32 %s14, 1
      %s22 = ssub.s32 %s14, %s21
      %p23 = scmp.eq.s32.totalorder %s22, 0
      %s25 = sadd.s32 %s24, 1
      %s26 = scalar_select %p23, %s24, %s25
      %p29 = pneg %p23
      %p30 = scmp.eq.s32.totalorder %s14, 1
      %p31 = por %p29, %p30
      %p32 = scmp.ne.s32.totalorder %s24, %s27
      %p33 = scmp.eq.s32.totalorder %s14, 0
      %p34 = por %p32, %p33
      %p35 = scmp.ne.s32.totalorder %s24, %s27
      %p36 = scmp.eq.s32.totalorder %s19, 1
      %p37 = por %p35, %p36
      %p38 = scmp.ne.s32.totalorder %s27, %s28
      %p39 = scmp.eq.s32.totalorder %s19, 0
      %p40 = por %p38, %p39
      %p41 = scmp.ne.s32.totalorder %s27, %s28
      %p42 = scmp.eq.s32.totalorder %s20, 1
      %p43 = por %p41, %p42
      %p45 = scmp.ne.s32.totalorder %s28, %s44
      %p46 = scmp.eq.s32.totalorder %s20, 0
      %p47 = por %p45, %p46
      %s49 = sadd.s32 %s48, 1
      %p52 = scmp.eq.s32.totalorder %s14, 1
      %p53 = scmp.ne.s32.totalorder %s48, %s50
      %p54 = scmp.eq.s32.totalorder %s14, 0
      %p55 = por %p53, %p54
      %p56 = scmp.ne.s32.totalorder %s48, %s50
      %p57 = scmp.eq.s32.totalorder %s19, 1
      %p58 = por %p56, %p57
      %p59 = scmp.ne.s32.totalorder %s50, %s51
      %p60 = scmp.eq.s32.totalorder %s19, 0
      %p61 = por %p59, %p60
      %p62 = scmp.ne.s32.totalorder %s50, %s51
      %p63 = scmp.eq.s32.totalorder %s20, 1
      %p64 = por %p62, %p63
      %p66 = scmp.ne.s32.totalorder %s51, %s65
      %p67 = scmp.eq.s32.totalorder %s20, 0
      %p68 = por %p66, %p67
      %s70 = sadd.s32 %s69, 1
      %p73 = scmp.eq.s32.totalorder %s14, 1
      %p74 = scmp.ne.s32.totalorder %s69, %s71
      %p75 = scmp.eq.s32.totalorder %s14, 0
      %p76 = por %p74, %p75
      %p77 = scmp.ne.s32.totalorder %s69, %s71
      %p78 = scmp.eq.s32.totalorder %s19, 1
      %p79 = por %p77, %p78
      %p80 = scmp.ne.s32.totalorder %s71, %s72
      %p81 = scmp.eq.s32.totalorder %s19, 0
      %p82 = por %p80, %p81
      %p83 = scmp.ne.s32.totalorder %s71, %s72
      %p84 = scmp.eq.s32.totalorder %s20, 1
      %p85 = por %p83, %p84
      %p87 = scmp.ne.s32.totalorder %s72, %s86
      %p88 = scmp.eq.s32.totalorder %s20, 0
      %p89 = por %p87, %p88
      %s91 = sadd.s32 %s90, 1
      %p94 = scmp.eq.s32.totalorder %s14, 1
      %p95 = scmp.ne.s32.totalorder %s90, %s92
      %p96 = scmp.eq.s32.totalorder %s14, 0
      %p97 = por %p95, %p96
      %p98 = scmp.ne.s32.totalorder %s90, %s92
      %p99 = scmp.eq.s32.totalorder %s19, 1
      %p100 = por %p98, %p99
      %p101 = scmp.ne.s32.totalorder %s92, %s93
      %p102 = scmp.eq.s32.totalorder %s19, 0
      %p103 = por %p101, %p102
      %p104 = scmp.ne.s32.totalorder %s92, %s93
      %p105 = scmp.eq.s32.totalorder %s20, 1
      %p106 = por %p104, %p105
      %p108 = scmp.ne.s32.totalorder %s93, %s107
      %p109 = scmp.eq.s32.totalorder %s20, 0
      %p110 = por %p108, %p109
      %s112 = sadd.s32 %s111, 1
      %p115 = scmp.eq.s32.totalorder %s14, 1
      %p116 = scmp.ne.s32.totalorder %s111, %s113
      %p117 = scmp.eq.s32.totalorder %s14, 0
      %p118 = por %p116, %p117
      %p119 = scmp.ne.s32.totalorder %s111, %s113
      %p120 = scmp.eq.s32.totalorder %s19, 1
      %p121 = por %p119, %p120
      %p122 = scmp.ne.s32.totalorder %s113, %s114
      %p123 = scmp.eq.s32.totalorder %s19, 0
      %p124 = por %p122, %p123
      %p125 = scmp.ne.s32.totalorder %s113, %s114
      %p126 = scmp.eq.s32.totalorder %s20, 1
      %p127 = por %p125, %p126
      %p129 = scmp.ne.s32.totalorder %s114, %s128
      %p130 = scmp.eq.s32.totalorder %s20, 0
      %p131 = por %p129, %p130
      %s132 = ssub.s32 %s14, %s21
      %p133 = scmp.eq.s32.totalorder %s132, 0
      %s135 = sadd.s32 %s134, 1
      %s136 = scalar_select %p133, %s134, %s135
      %p139 = pneg %p133
      %p140 = scmp.eq.s32.totalorder %s14, 1
      %p141 = por %p139, %p140
      %p142 = scmp.ne.s32.totalorder %s134, %s137
      %p143 = scmp.eq.s32.totalorder %s14, 0
      %p144 = por %p142, %p143
      %p145 = scmp.ne.s32.totalorder %s134, %s137
      %p146 = scmp.eq.s32.totalorder %s19, 1
      %p147 = por %p145, %p146
      %p148 = scmp.ne.s32.totalorder %s137, %s138
      %p149 = scmp.eq.s32.totalorder %s19, 0
      %p150 = por %p148, %p149
      %p151 = scmp.ne.s32.totalorder %s137, %s138
      %p152 = scmp.eq.s32.totalorder %s20, 1
      %p153 = por %p151, %p152
      %p155 = scmp.ne.s32.totalorder %s138, %s154
      %p156 = scmp.eq.s32.totalorder %s20, 0
      %p157 = por %p155, %p156
      %p158 = scmp.le.s32.totalorder 1, %s14
      %p159 = scmp.lt.s32.totalorder %s14, 3
      %p160 = pnand %p158, %p159
      %p161 = pneg %p160
      // Predicated region
      $region9: #{tpu_custom_call.1} parent=5 // pred_check
        _
      $region10: #{tpu_custom_call.1} parent=5 // pred_check_branch
        %163 = sbr.rel (%p160) target = $region12
      $region11: #{tpu_custom_call.1} parent=5 // pred_region
        %s164 = ssub.s32 %s14, 1
        // Predicated region
        $region13: #{tpu_custom_call.1} parent=11 // pred_check
          %p165 = pneg %p61
        $region14: #{tpu_custom_call.1} parent=11 // pred_check_branch
          %167 = sbr.rel (%p165) target = $region16
        $region15: #{tpu_custom_call.1} parent=11 // pred_region
          _
        $region16: #{tpu_custom_call.1} parent=11 // pred_fallthru
          _
        // Predicated region
        $region17: #{tpu_custom_call.1} parent=11 // pred_check
          %p168 = pneg %p82
        $region18: #{tpu_custom_call.1} parent=11 // pred_check_branch
          %170 = sbr.rel (%p168) target = $region20
        $region19: #{tpu_custom_call.1} parent=11 // pred_region
          _
        $region20: #{tpu_custom_call.1} parent=11 // pred_fallthru
          _
        // Predicated region
        $region21: #{tpu_custom_call.1} parent=11 // pred_check
          %p171 = pneg %p103
        $region22: #{tpu_custom_call.1} parent=11 // pred_check_branch
          %173 = sbr.rel (%p171) target = $region24
        $region23: #{tpu_custom_call.1} parent=11 // pred_region
          _
        $region24: #{tpu_custom_call.1} parent=11 // pred_fallthru
          _
        // Predicated region
        $region25: #{tpu_custom_call.1} parent=11 // pred_check
          %p174 = pneg %p124
        $region26: #{tpu_custom_call.1} parent=11 // pred_check_branch
          %176 = sbr.rel (%p174) target = $region28
        $region27: #{tpu_custom_call.1} parent=11 // pred_region
          _
        $region28: #{tpu_custom_call.1} parent=11 // pred_fallthru
          _
      $region12: #{tpu_custom_call.1} parent=5 // pred_fallthru
        _
      %p177 = scmp.lt.s32.totalorder %s14, 2
      // Predicated region
      $region29: #{tpu_custom_call.1} parent=5 // pred_check
        %p178 = pneg %p177
      $region30: #{tpu_custom_call.1} parent=5 // pred_check_branch
        %180 = sbr.rel (%p178) target = $region32
      $region31: #{tpu_custom_call.1} parent=5 // pred_region
        // Predicated region
        $region33: #{tpu_custom_call.1} parent=31 // pred_check
          %p181 = pneg %p34
        $region34: #{tpu_custom_call.1} parent=31 // pred_check_branch
          %183 = sbr.rel (%p181) target = $region36
        $region35: #{tpu_custom_call.1} parent=31 // pred_region
          %s184 = sand.u32 %s24, 1
          %s185 = sand.u32 %s24, 1
          %s186 = smul.addr %s185, 12
          %s187 = scalar_lea.vmem [#allocation2], %s186
          %s188 = smul.addr %s14, 4
          %s189 = scalar_lea.vmem %s0, %s188
          // Predicated region
          $region37: #{tpu_custom_call.1} parent=35 // pred_check
            _
          $region38: #{tpu_custom_call.1} parent=35 // pred_check_branch
            %191 = sbr.rel (0) target = $region40
          $region39: #{tpu_custom_call.1} parent=35 // pred_region
            // Predicated region
            $region41: #{tpu_custom_call.1} parent=39 // pred_check
              _
            $region42: #{tpu_custom_call.1} parent=39 // pred_check_branch
              %193 = sbr.rel target = $region44
            $region43: #{tpu_custom_call.1} parent=39 // pred_region
              // Predicated region
              $region56: #{tpu_custom_call.1} parent=43 // pred_check
                _
              $region57: #{tpu_custom_call.1} parent=43 // pred_check_branch
                %212 = sbr.rel (0) target = $region59
              $region58: #{tpu_custom_call.1} parent=43 // pred_region
                loop: start=0, step=1, limit=1
                $region60: #{tpu_custom_call.1} parent=58 // loop_pre_header
                  _
                $region61: #{tpu_custom_call.1} parent=58 // loop_header
                  %s214 = sphi 0, %s218
                  %p215 = scmp.ge.s32.totalorder %s214, 1
                  %s219 = sphi %s189, %s189
                  %s220 = sphi %s187, %s187
                $region62: #{tpu_custom_call.1} parent=58 // loop_header_branch
                  %217 = sbr.rel (%p215) target = $region66
                $region63: #{tpu_custom_call.1} parent=58 // loop_body
                  _
                $region64: #{tpu_custom_call.1} parent=58 // loop_footer
                  %s218 = sadd.s32 1, %s214
                $region65: #{tpu_custom_call.1} parent=58 // loop_footer_branch
                  %213 = sbr.rel target = $region61
                $region66: #{tpu_custom_call.1} parent=58 // loop_exit
                  _
                loop: start=0, step=1, limit=1
                $region67: #{tpu_custom_call.1} parent=58 // loop_pre_header
                  _
                $region68: #{tpu_custom_call.1} parent=58 // loop_header
                  %s223 = sphi 0, %s227
                  %p224 = scmp.ge.s32.totalorder %s223, 1
                  %s228 = sphi %s189, %s189
                  %s229 = sphi %s187, %s187
                $region69: #{tpu_custom_call.1} parent=58 // loop_header_branch
                  %226 = sbr.rel (%p224) target = $region73
                $region70: #{tpu_custom_call.1} parent=58 // loop_body
                  %v230 = vld [vmem:[%s228] sm:$0xf]
                  %231 = vst [vmem:[%s229] sm:$0xf] %v230
                  %v232 = vld [vmem:[%s228 + $0x8] sm:$0xf]
                  %233 = vst [vmem:[%s229 + $0x4] sm:$0xf] %v232
                  %v234 = vld [vmem:[%s228 + $0x10] sm:$0xf]
                  %235 = vst [vmem:[%s229 + $0x8] sm:$0xf] %v234
                $region71: #{tpu_custom_call.1} parent=58 // loop_footer
                  %s227 = sadd.s32 1, %s223
                $region72: #{tpu_custom_call.1} parent=58 // loop_footer_branch
                  %222 = sbr.rel target = $region68
                $region73: #{tpu_custom_call.1} parent=58 // loop_exit
                  _
              $region59: #{tpu_custom_call.1} parent=43 // pred_fallthru
                _
            $region44: #{tpu_custom_call.1} parent=39 // pred_fallthru
              _
            // Predicated region
            $region45: #{tpu_custom_call.1} parent=39 // pred_check
              _
            $region46: #{tpu_custom_call.1} parent=39 // pred_check_branch
              %195 = sbr.rel (0) target = $region48
            $region47: #{tpu_custom_call.1} parent=39 // pred_region
              loop: start=0, step=1, limit=1
              $region49: #{tpu_custom_call.1} parent=47 // loop_pre_header
                _
              $region50: #{tpu_custom_call.1} parent=47 // loop_header
                %s198 = sphi 0, %s202
                %p199 = scmp.ge.s32.totalorder %s198, 1
                %s203 = sphi %s189, %s189
                %s204 = sphi %s187, %s187
              $region51: #{tpu_custom_call.1} parent=47 // loop_header_branch
                %201 = sbr.rel (%p199) target = $region55
              $region52: #{tpu_custom_call.1} parent=47 // loop_body
                %v205 = vld [vmem:[%s203] sm:$0xf]
                %206 = vst [vmem:[%s204] sm:$0xf] %v205
                %v207 = vld [vmem:[%s203 + $0x8] sm:$0xf]
                %208 = vst [vmem:[%s204 + $0x4] sm:$0xf] %v207
                %v209 = vld [vmem:[%s203 + $0x10] sm:$0xf]
                %210 = vst [vmem:[%s204 + $0x8] sm:$0xf] %v209
              $region53: #{tpu_custom_call.1} parent=47 // loop_footer
                %s202 = sadd.s32 1, %s198
              $region54: #{tpu_custom_call.1} parent=47 // loop_footer_branch
                %197 = sbr.rel target = $region50
              $region55: #{tpu_custom_call.1} parent=47 // loop_exit
                _
            $region48: #{tpu_custom_call.1} parent=39 // pred_fallthru
              _
          $region40: #{tpu_custom_call.1} parent=35 // pred_fallthru
            _
          %236 = vnop
        $region36: #{tpu_custom_call.1} parent=31 // pred_fallthru
          _
      $region32: #{tpu_custom_call.1} parent=5 // pred_fallthru
        _
      %p237 = scmp.le.s32.totalorder 1, %s14
      %p238 = scmp.lt.s32.totalorder %s14, 3
      %p239 = pnand %p237, %p238
      %p240 = pneg %p239
      // Predicated region
      $region74: #{tpu_custom_call.1} parent=5 // pred_check
        _
      $region75: #{tpu_custom_call.1} parent=5 // pred_check_branch
        %242 = sbr.rel (%p239) target = $region77
      $region76: #{tpu_custom_call.1} parent=5 // pred_region
        %s243 = ssub.s32 %s14, 1
        %s244 = sand.u32 %s27, 1
        %s245 = sand.u32 %s27, 1
        %s246 = smul.addr %s245, 12
        %s247 = scalar_lea.vmem [#allocation2], %s246
        // Predicated region
        $region78: #{tpu_custom_call.1} parent=76 // pred_check
          %p248 = pneg %p40
        $region79: #{tpu_custom_call.1} parent=76 // pred_check_branch
          %250 = sbr.rel (%p248) target = $region81
        $region80: #{tpu_custom_call.1} parent=76 // pred_region
          _
        $region81: #{tpu_custom_call.1} parent=76 // pred_fallthru
          _
        %s251 = sand.u32 %s27, 1
        %s252 = sand.u32 %s27, 1
        %s253 = smul.addr %s252, 12
        %s254 = scalar_lea.vmem [#allocation2], %s253
        %p255 = pneg %p40
        %p256 = pneg %p37
        %p257 = pneg %p61
        %p258 = pneg %p58
        %p259 = pneg %p82
        %p260 = pneg %p79
        %p261 = pneg %p103
        %p262 = pneg %p100
        %p263 = pneg %p124
        %p264 = pneg %p121
        %p265 = pneg %p150
        %p266 = pneg %p147
        %s267 = sand.u32 %s137, 1
        %s268 = scalar_lea.sflag [#allocation4], %s267
        %s269 = sand.u32 %s137, 1
        %s270 = smul.addr %s269, 4
        %s271 = scalar_lea.vmem [#allocation3], %s270
        %v273 = vld [vmem:[%s247] sm:$0xf]
        %v274 = vld [vmem:[%s247 + $0x4] sm:$0xf]
        %v275 = vld [vmem:[%s247 + $0x8] sm:$0x3]
        %v276 = vld [vmem:[%s1] sm:$0xf]
        %v277 = vld [vmem:[%s1 + $0x4] sm:$0xf]
        %v278 = vld [vmem:[%s1 + $0x8] sm:$0xf]
        %v279 = vld [vmem:[%s1 + $0xc] sm:$0xf]
        %v280 = vld [vmem:[%s1 + $0x10] sm:$0xf]
        %v281 = vld [vmem:[%s1 + $0x14] sm:$0xf]
        %v282 = vld [vmem:[%s1 + $0x18] sm:$0xf]
        %v283 = vld [vmem:[%s1 + $0x1c] sm:$0xf]
        %v284 = vld [vmem:[%s2] sm:$0xff]
        %v285 = vld [vmem:[%s2 + $0x8] sm:$0xff]
        %v286 = vld [vmem:[%s2 + $0x10] sm:$0xff]
        %v287 = vld [vmem:[%s2 + $0x18] sm:$0xff]
        %v288 = vld [vmem:[%s2 + $0x20] sm:$0xff]
        %v289 = vld [vmem:[%s2 + $0x28] sm:$0xff]
        %v290 = vld [vmem:[%s2 + $0x30] sm:$0xff]
        %v291 = vld [vmem:[%s2 + $0x38] sm:$0xff]
        %293 = vset.pattern.permute.xlu0 0
        %294 = vperm.xlu0 %293, %v284
        %v295 = vpop.permute.xlu0 %294
        %298 = vset.pattern.permute.xlu0 0
        %299 = vperm.xlu0 %298, %v285
        %v300 = vpop.permute.xlu0 %299
        %303 = vset.pattern.permute.xlu0 0
        %304 = vperm.xlu0 %303, %v286
        %v305 = vpop.permute.xlu0 %304
        %308 = vset.pattern.permute.xlu0 0
        %309 = vperm.xlu0 %308, %v287
        %v310 = vpop.permute.xlu0 %309
        %313 = vset.pattern.permute.xlu0 0
        %314 = vperm.xlu0 %313, %v288
        %v315 = vpop.permute.xlu0 %314
        %318 = vset.pattern.permute.xlu0 0
        %319 = vperm.xlu0 %318, %v289
        %v320 = vpop.permute.xlu0 %319
        %323 = vset.pattern.permute.xlu0 0
        %324 = vperm.xlu0 %323, %v290
        %v325 = vpop.permute.xlu0 %324
        %328 = vset.pattern.permute.xlu0 0
        %329 = vperm.xlu0 %328, %v291
        %v330 = vpop.permute.xlu0 %329
        %v340 = vunpack.c.l.b16 %v276
        %v341 = vunpack.c.l.b16 %v277
        %v342 = vunpack.c.l.b16 %v278
        %v343 = vunpack.c.l.b16 %v279
        %v344 = vunpack.c.l.b16 %v280
        %v345 = vunpack.c.l.b16 %v281
        %v346 = vunpack.c.l.b16 %v282
        %v347 = vunpack.c.l.b16 %v283
        %v348 = vpack.c.b16 %v341, %v340
        %v349 = vpack.c.b16 %v343, %v342
        %v350 = vpack.c.b16 %v345, %v344
        %v351 = vpack.c.b16 %v347, %v346
        %v355 = vunpack.c.l.b16 %v273
        %v356 = vunpack.c.l.b16 %v274
        %v357 = vunpack.c.l.b16 %v275
        %v358 = vpack.c.b16 %v356, %v355
        %v359 = vpack.c.b16 %v357, %v357
        %vm361 = vcmask 162816
        %v363 = vsel %vm361, %v348, 0
        %v366 = vsel %vm361, %v349, 0
        %v369 = vsel %vm361, %v350, 0
        %v372 = vsel %vm361, %v351, 0
        %vm374 = vcmask 1041408
        %v376 = vsel %vm374, %v359, 0
        %378 = vmatprep.subr.bf16.mxu0 0
        %379 = vmatpush1.bf16.msra.mxu0 %v358
        %380 = vmatprep.subr.bf16.mxu0 0
        %381 = vmatpush1.bf16.msra.mxu0 %v376
        %382 = vmatprep.subr.bf16.mxu0 0
        %383 = vmatpush1.bf16.msra.mxu0 0
        %384 = vmatprep.subr.bf16.mxu0 0
        %385 = vmatpush1.bf16.msra.mxu0 0
        %386 = vmatprep.subr.bf16.mxu0 0
        %387 = vmatpush1.bf16.msra.mxu0 0
        %388 = vmatprep.subr.bf16.mxu0 0
        %389 = vmatpush1.bf16.msra.mxu0 0
        %390 = vmatprep.subr.bf16.mxu0 0
        %391 = vmatpush1.bf16.msra.mxu0 0
        %392 = vmatprep.subr.bf16.mxu0 0
        %393 = vmatpush1.bf16.msra.mxu0 0
        %394 = vmatprep.subr.bf16.mxu0 0
        %395 = vmatpush1.bf16.msra.mxu0 0
        %396 = vmatprep.subr.bf16.mxu0 0
        %397 = vmatpush1.bf16.msra.mxu0 0
        %398 = vmatprep.subr.bf16.mxu0 0
        %399 = vmatpush1.bf16.msra.mxu0 0
        %400 = vmatprep.subr.bf16.mxu0 0
        %401 = vmatpush1.bf16.msra.mxu0 0
        %402 = vmatprep.subr.bf16.mxu0 0
        %403 = vmatpush1.bf16.msra.mxu0 0
        %404 = vmatprep.subr.bf16.mxu0 0
        %405 = vmatpush1.bf16.msra.mxu0 0
        %406 = vmatprep.subr.bf16.mxu0 0
        %407 = vmatpush1.bf16.msra.mxu0 0
        %408 = vmatprep.subr.bf16.mxu0 0
        %409 = vmatpush1.bf16.msra.mxu0 0
        %410 = vmatprep.mubr.bf16.mxu0 0
        %411 = vmatmul.mubr.bf16.gmra.mrb[0].mxu0 %v363
        %v412 = vpop.f32.mrb[0].mxu0
        %v413 = vadd.f32 %v295, %v412
        %v414 = vpop.f32.mrb[0].mxu0
        %v415 = vpop.f32.mrb[0].mxu0
        %v416 = vadd.f32 %v300, %v415
        %v417 = vpop.f32.mrb[0].mxu0
        %418 = vmatprep.mubr.bf16.mxu0 0
        %419 = vmatmul.mubr.bf16.gmra.mrb[0].mxu0 %v366
        %v420 = vpop.f32.mrb[0].mxu0
        %v421 = vadd.f32 %v305, %v420
        %v422 = vpop.f32.mrb[0].mxu0
        %v423 = vpop.f32.mrb[0].mxu0
        %v424 = vadd.f32 %v310, %v423
        %v425 = vpop.f32.mrb[0].mxu0
        %426 = vmatprep.mubr.bf16.mxu0 0
        %427 = vmatmul.mubr.bf16.gmra.mrb[0].mxu0 %v369
        %v428 = vpop.f32.mrb[0].mxu0
        %v429 = vadd.f32 %v315, %v428
        %v430 = vpop.f32.mrb[0].mxu0
        %v431 = vpop.f32.mrb[0].mxu0
        %v432 = vadd.f32 %v320, %v431
        %v433 = vpop.f32.mrb[0].mxu0
        %434 = vmatprep.mubr.bf16.mxu0 0
        %435 = vmatmul.mubr.bf16.gmra.mrb[0].mxu0 %v372
        %v436 = vpop.f32.mrb[0].mxu0
        %v437 = vadd.f32 %v325, %v436
        %v438 = vpop.f32.mrb[0].mxu0
        %v439 = vpop.f32.mrb[0].mxu0
        %v440 = vadd.f32 %v330, %v439
        %v441 = vpop.f32.mrb[0].mxu0
        %442 = vdwg.mxu0
        %v443 = vmax.f32 %v413, 0.0
        %v444 = vmax.f32 %v416, 0.0
        %v445 = vmax.f32 %v421, 0.0
        %v446 = vmax.f32 %v424, 0.0
        %v447 = vmax.f32 %v429, 0.0
        %v448 = vmax.f32 %v432, 0.0
        %v449 = vmax.f32 %v437, 0.0
        %v450 = vmax.f32 %v440, 0.0
        %v451 = vld [vmem:[%s3] sm:$0x3]
        %v452 = vpack.c.bf16 %v444, %v443
        %v453 = vpack.c.bf16 %v446, %v445
        %v454 = vpack.c.bf16 %v448, %v447
        %v455 = vpack.c.bf16 %v450, %v449
        %v456 = vld [vmem:[%s4] sm:$0x7]
        %458 = vset.pattern.permute.xlu0 0
        %459 = vperm.xlu0 %458, %v456
        %v460 = vpop.permute.xlu0 %459
        %vm462 = vcmask 523264
        %v464 = vsel %vm462, %v451, 0
        %466 = vmatprep.subr.bf16.mxu0 0
        %467 = vmatpush1.bf16.msra.mxu0 %v452
        %468 = vmatprep.subr.bf16.mxu0 0
        %469 = vmatpush1.bf16.msra.mxu0 %v453
        %470 = vmatprep.subr.bf16.mxu0 0
        %471 = vmatpush1.bf16.msra.mxu0 %v454
        %472 = vmatprep.subr.bf16.mxu0 0
        %473 = vmatpush1.bf16.msra.mxu0 %v455
        %474 = vmatprep.subr.bf16.mxu0 0
        %475 = vmatpush1.bf16.msra.mxu0 0
        %476 = vmatprep.subr.bf16.mxu0 0
        %477 = vmatpush1.bf16.msra.mxu0 0
        %478 = vmatprep.subr.bf16.mxu0 0
        %479 = vmatpush1.bf16.msra.mxu0 0
        %480 = vmatprep.subr.bf16.mxu0 0
        %481 = vmatpush1.bf16.msra.mxu0 0
        %482 = vmatprep.subr.bf16.mxu0 0
        %483 = vmatpush1.bf16.msra.mxu0 0
        %484 = vmatprep.subr.bf16.mxu0 0
        %485 = vmatpush1.bf16.msra.mxu0 0
        %486 = vmatprep.subr.bf16.mxu0 0
        %487 = vmatpush1.bf16.msra.mxu0 0
        %488 = vmatprep.subr.bf16.mxu0 0
        %489 = vmatpush1.bf16.msra.mxu0 0
        %490 = vmatprep.subr.bf16.mxu0 0
        %491 = vmatpush1.bf16.msra.mxu0 0
        %492 = vmatprep.subr.bf16.mxu0 0
        %493 = vmatpush1.bf16.msra.mxu0 0
        %494 = vmatprep.subr.bf16.mxu0 0
        %495 = vmatpush1.bf16.msra.mxu0 0
        %496 = vmatprep.subr.bf16.mxu0 0
        %497 = vmatpush1.bf16.msra.mxu0 0
        %498 = vmatprep.mubr.bf16.mxu0 0
        %499 = vmatmul.mubr.bf16.gmra.mrb[0].mxu0 %v464
        %v500 = vpop.f32.mrb[0].mxu0
        %v501 = vadd.f32 %v460, %v500
        %v502 = vpop.f32.mrb[0].mxu0
        %v503 = vpop.f32.mrb[0].mxu0
        %v504 = vpop.f32.mrb[0].mxu0
        %505 = vdwg.mxu0
        %506 = vst [vmem:[%s271] sm:$0x7] %v501
        %s507 = sand.u32 %s137, 1
        %s508 = scalar_lea.sflag [#allocation4], %s507
        %s509 = sand.u32 %s137, 1
        %s510 = smul.addr %s509, 4
        %s511 = scalar_lea.vmem [#allocation3], %s510
        // Predicated region
        $region82: #{tpu_custom_call.1} parent=76 // pred_check
          %p512 = pneg %p147
        $region83: #{tpu_custom_call.1} parent=76 // pred_check_branch
          %514 = sbr.rel (%p512) target = $region85
        $region84: #{tpu_custom_call.1} parent=76 // pred_region
          %s516 = ssub.s32 64, 64
          %517 = vsyncadd %s508, %s516
          %s518 = smul.addr %s19, 64
          %s519 = scalar_lea.hbm %s5, %s518
          %s521 = sshll.u32 %s511, 4
          %s522 = int_to_ptr.vmem [resolvable:$true] %s521
          %524 = dma.vmem_to_hbm [thread:$0]  %s522, 64, %s519, %s508
        $region85: #{tpu_custom_call.1} parent=76 // pred_fallthru
          _
      $region77: #{tpu_custom_call.1} parent=5 // pred_fallthru
        _
      %p525 = scmp.le.s32.totalorder 2, %s14
      // Predicated region
      $region86: #{tpu_custom_call.1} parent=5 // pred_check
        %p526 = pneg %p525
      $region87: #{tpu_custom_call.1} parent=5 // pred_check_branch
        %528 = sbr.rel (%p526) target = $region89
      $region88: #{tpu_custom_call.1} parent=5 // pred_region
        %s529 = ssub.s32 %s14, 2
        // Predicated region
        $region90: #{tpu_custom_call.1} parent=88 // pred_check
          %p530 = pneg %p153
        $region91: #{tpu_custom_call.1} parent=88 // pred_check_branch
          %532 = sbr.rel (%p530) target = $region93
        $region92: #{tpu_custom_call.1} parent=88 // pred_region
          %s533 = sand.u32 %s138, 1
          %s534 = scalar_lea.sflag [#allocation4], %s533
          %s535 = sand.u32 %s138, 1
          %s536 = smul.addr %s535, 4
          %s537 = scalar_lea.vmem [#allocation3], %s536
          %538 = dma.done %s534, 64
        $region93: #{tpu_custom_call.1} parent=88 // pred_fallthru
          _
      $region89: #{tpu_custom_call.1} parent=5 // pred_fallthru
        _
    $region6: #{tpu_custom_call.1} parent=1 // loop_footer
      %s18 = sadd.s32 1, %s14
    $region7: #{tpu_custom_call.1} parent=1 // loop_footer_branch
      %13 = sbr.rel target = $region3
    $region8: #{tpu_custom_call.1} parent=1 // loop_exit
      _
    %539 = vsyncpa [#allocation4], 1
    %s540 = scalar_lea.sflag [#allocation4], 1
    %541 = vsyncpa %s540, 1

</llo_original>
